<compile_context>
chip_gen: v6e
topology: v6e:2x2x1
jax: 0.10.0
libtpu: 0.0.40
codegen_flags: <defaults>
</compile_context>

<pallas_src>
import functools
import math

import jax
import jax.numpy as jnp
import numpy as np
from jax import lax
from jax.experimental import pallas as pl
from jax.experimental.pallas import tpu as pltpu


def _round_up(x, m):
    return (x + m - 1) // m * m


# ---------------------------------------------------------------------------
# Pallas kernel: per-pattern matmul + fused bias (single pass)
#   p_ref: (tm, K) bf16/f32   w_ref: (K, Cout_pad) bf16/f32
#   b_ref: (1, Cout_pad) f32  o_ref: (tm, Cout_pad) f32
# ---------------------------------------------------------------------------
def _pa_matmul_bias_kernel(p_ref, w_ref, b_ref, o_ref):
    y = jnp.dot(p_ref[...], w_ref[...], preferred_element_type=jnp.float32)
    o_ref[...] = y + b_ref[...]


# ---------------------------------------------------------------------------
# Wrapper: pa_conv2d forward
# ---------------------------------------------------------------------------
@functools.partial(jax.jit, static_argnames=("tm_max", "use_bf16"))
def pa_conv2d_forward(x, weights, biases, *, tm_max=1024, use_bf16=True):
    """x: (N, Cin, H, W) f32; weights: (P*P, Cout, Cin, k, k) OIHW; biases: (P*P, Cout)."""
    N, Cin, H, W = x.shape
    PP, Cout, _, k, _ = weights.shape
    P = int(round(math.sqrt(PP)))
    pad = k // 2
    Ho, Wo = H // P, W // P
    Mp = N * Ho * Wo                       # rows per pattern
    K = Cin * k * k

    # --- glue: replication pad (NHWC) + dense im2col via 9 shifted slices ----------------
    x_nhwc = jnp.transpose(x, (0, 2, 3, 1))
    x_pad = jnp.pad(x_nhwc, ((0, 0), (pad, pad), (pad, pad), (0, 0)), mode="edge")
    taps = [x_pad[:, ky:ky + H, kx:kx + W, :] for ky in range(k) for kx in range(k)]
    dense = jnp.stack(taps, axis=3)                         # (N, H, W, k*k, Cin)
    dense = dense.reshape(N, Ho, P, Wo, P, K)               # K order = (ky, kx, ci)
    patches = dense.transpose(2, 4, 0, 1, 3, 5).reshape(PP, Mp, K)

    # per-pattern weight matrices with matching K order (ky, kx, ci)
    w_mat = weights.transpose(0, 3, 4, 2, 1).reshape(PP, K, Cout)

    # --- lane-dense Cout padding + adaptive row tiles (no divisibility assert) -----------
    Cout_pad = _round_up(Cout, 128)
    tm = min(tm_max, _round_up(Mp, 8))
    Mp_pad = _round_up(Mp, tm)

    patches = jnp.pad(patches, ((0, 0), (0, Mp_pad - Mp), (0, 0)))
    w_mat = jnp.pad(w_mat, ((0, 0), (0, 0), (0, Cout_pad - Cout)))
    b_mat = jnp.pad(biases, ((0, 0), (0, Cout_pad - Cout)))
    b_mat = b_mat.reshape(PP, 1, Cout_pad).astype(jnp.float32)

    mm_dtype = jnp.bfloat16 if use_bf16 else jnp.float32
    patches = patches.astype(mm_dtype)
    w_mat = w_mat.astype(mm_dtype)

    grid = (PP, Mp_pad // tm)

    out = pl.pallas_call(
        _pa_matmul_bias_kernel,
        out_shape=jax.ShapeDtypeStruct((PP, Mp_pad, Cout_pad), jnp.float32),
        grid_spec=pltpu.PrefetchScalarGridSpec(
            num_scalar_prefetch=0,
            grid=grid,
            in_specs=[
                pl.BlockSpec((None, tm, K), lambda g, m: (g, m, 0)),
                pl.BlockSpec((None, K, Cout_pad), lambda g, m: (g, 0, 0)),
                pl.BlockSpec((None, 1, Cout_pad), lambda g, m: (g, 0, 0)),
            ],
            out_specs=pl.BlockSpec((None, tm, Cout_pad), lambda g, m: (g, m, 0)),
        ),
        compiler_params=pltpu.CompilerParams(
            dimension_semantics=("parallel", "parallel"),
        ),
    )(patches, w_mat, b_mat)

    # --- un-pad + pixel-shuffle layout back to NCHW ---------------------------------------
    out = out[:, :Mp, :Cout].reshape(P, P, N, Ho, Wo, Cout)
    out = out.transpose(2, 5, 3, 0, 4, 1).reshape(N, Cout, H, W)
    return out


# ---------------------------------------------------------------------------
# Pure-JAX reference (mirrors the PyTorch code path: pad, 16 strided convs,
# stack, view, PixelShuffle) for validation.
# ---------------------------------------------------------------------------
def _reference(x, weights, biases):
    N, Cin, H, W = x.shape
    PP, Cout, _, k, _ = weights.shape
    P = int(round(math.sqrt(PP)))
    pad = k // 2
    xp = jnp.pad(x, ((0, 0), (0, 0), (pad, pad), (pad, pad)), mode="edge")
    hp, wp = xp.shape[2], xp.shape[3]
    outs = []
    for i in range(P):
        for j in range(P):
            sl = xp[:, :, i:hp - P + i + 1, j:wp - P + j + 1]
            y = lax.conv_general_dilated(
                sl, weights[i * P + j], window_strides=(P, P),
                padding=((0, 0), (0, 0)),
                dimension_numbers=("NCHW", "OIHW", "NCHW"))
            outs.append(y + biases[i * P + j].reshape(1, Cout, 1, 1))
    stacked = jnp.stack(outs, axis=2).reshape(N, Cout * P * P, H // P, W // P)
    ps = stacked.reshape(N, Cout, P, P, H // P, W // P)
    return ps.transpose(0, 1, 4, 2, 5, 3).reshape(N, Cout, H, W)


if __name__ == "__main__":
    N, Cin, Cout, H, W = 2, 4, 8, 16, 16
    P, k = 4, 3

    key = jax.random.PRNGKey(0)
    kx, kw, kb = jax.random.split(key, 3)
    x = jax.random.normal(kx, (N, Cin, H, W), dtype=jnp.float32)
    # 16 per-pattern Conv2d weights (OIHW layout) with the module's truncated-normal scale.
    std = math.sqrt(1.3 * 2.0 / (k * k * Cin))
    weights = std * jax.random.truncated_normal(
        kw, -2.0, 2.0, (P * P, Cout, Cin, k, k), dtype=jnp.float32)
    biases = 0.1 * jax.random.normal(kb, (P * P, Cout), dtype=jnp.float32)

    out = pa_conv2d_forward(x, weights, biases)
    out = jax.block_until_ready(out)
    assert out.shape == (N, Cout, H, W), out.shape

    ref = _reference(x, weights, biases)
    # bf16 matmul inputs vs f32 reference -> loose-but-meaningful tolerance
    np.testing.assert_allclose(np.asarray(out), np.asarray(ref), atol=5e-2, rtol=5e-2)

    print("KERNEL_OK")
</pallas_src>

<mosaic_0001>
module attributes {stable_mosaic.version = 11 : i64} {
  func.func @_pa_matmul_bias_kernel(%arg0: i32, %arg1: i32, %arg2: memref<1x32x36xbf16, #tpu.memory_space<vmem>>, %arg3: memref<1x36x128xbf16, #tpu.memory_space<vmem>>, %arg4: memref<1x1x128xf32, #tpu.memory_space<vmem>>, %arg5: memref<1x32x128xf32, #tpu.memory_space<vmem>>) attributes {dimension_semantics = [#tpu.dimension_semantics<parallel>, #tpu.dimension_semantics<parallel>], iteration_bounds = array<i64: 16, 1>, scalar_prefetch = 0 : i64, scratch_operands = 0 : i64, tpu.core_type = #tpu.core_type<tc>, window_params = [{transform_indices = @transform_0, window_bounds = array<i64: 1, 32, 36>}, {transform_indices = @transform_1, window_bounds = array<i64: 1, 36, 128>}, {transform_indices = @transform_2, window_bounds = array<i64: 1, 1, 128>}, {transform_indices = @transform_3, window_bounds = array<i64: 1, 32, 128>}]} {
    %c0 = arith.constant 0 : index
    %c0_0 = arith.constant 0 : index
    %c0_1 = arith.constant 0 : index
    %0 = vector.load %arg2[%c0, %c0_0, %c0_1] : memref<1x32x36xbf16, #tpu.memory_space<vmem>>, vector<1x32x36xbf16>
    %1 = vector.shape_cast %0 : vector<1x32x36xbf16> to vector<32x36xbf16>
    %c0_2 = arith.constant 0 : index
    %c0_3 = arith.constant 0 : index
    %c0_4 = arith.constant 0 : index
    %2 = vector.load %arg3[%c0_2, %c0_3, %c0_4] : memref<1x36x128xbf16, #tpu.memory_space<vmem>>, vector<1x36x128xbf16>
    %3 = vector.shape_cast %2 : vector<1x36x128xbf16> to vector<36x128xbf16>
    %cst = arith.constant dense<0.000000e+00> : vector<32x128xf32>
    %4 = tpu.matmul %1, %3, %cst {dimension_numbers = #tpu.dot_dimension_numbers<[1], [0], [0], [1], [0, 0, 1, 1], [], []>} : vector<32x36xbf16>, vector<36x128xbf16>, vector<32x128xf32> -> vector<32x128xf32>
    %c0_5 = arith.constant 0 : index
    %c0_6 = arith.constant 0 : index
    %c0_7 = arith.constant 0 : index
    %5 = vector.load %arg4[%c0_5, %c0_6, %c0_7] : memref<1x1x128xf32, #tpu.memory_space<vmem>>, vector<1x1x128xf32>
    %6 = vector.shape_cast %5 : vector<1x1x128xf32> to vector<1x128xf32>
    %7 = vector.broadcast %6 : vector<1x128xf32> to vector<32x128xf32>
    %8 = arith.addf %4, %7 : vector<32x128xf32>
    %c0_8 = arith.constant 0 : index
    %c0_9 = arith.constant 0 : index
    %c0_10 = arith.constant 0 : index
    %9 = vector.load %arg5[%c0_8, %c0_9, %c0_10] : memref<1x32x128xf32, #tpu.memory_space<vmem>>, vector<1x32x128xf32>
    %10 = vector.shape_cast %9 : vector<1x32x128xf32> to vector<32x128xf32>
    %11 = vector.shape_cast %8 : vector<32x128xf32> to vector<1x32x128xf32>
    tpu.vector_store %arg5[%c0_8, %c0_9, %c0_10], %11 {strides = array<i32>} : memref<1x32x128xf32, #tpu.memory_space<vmem>>, vector<1x32x128xf32>,
    return
  }
  func.func @transform_0(%arg0: i32, %arg1: i32) -> (i32, i32, i32) {
    %c0_i32 = arith.constant 0 : i32
    %c0_i32_0 = arith.constant 0 : i32
    return %arg0, %arg1, %c0_i32 : i32, i32, i32
  }
  func.func @transform_1(%arg0: i32, %arg1: i32) -> (i32, i32, i32) {
    %c0_i32 = arith.constant 0 : i32
    %c0_i32_0 = arith.constant 0 : i32
    %c0_i32_1 = arith.constant 0 : i32
    return %arg0, %c0_i32, %c0_i32_0 : i32, i32, i32
  }
  func.func @transform_2(%arg0: i32, %arg1: i32) -> (i32, i32, i32) {
    %c0_i32 = arith.constant 0 : i32
    %c0_i32_0 = arith.constant 0 : i32
    %c0_i32_1 = arith.constant 0 : i32
    return %arg0, %c0_i32, %c0_i32_0 : i32, i32, i32
  }
  func.func @transform_3(%arg0: i32, %arg1: i32) -> (i32, i32, i32) {
    %c0_i32 = arith.constant 0 : i32
    %c0_i32_0 = arith.constant 0 : i32
    return %arg0, %arg1, %c0_i32 : i32, i32, i32
  }
}

</mosaic_0001>

<llo_original>
// kernel: pa_conv2d_forward.1
$region0: #{pa_conv2d_forward.1}
  #allocation0 [shape = 'u32[]', space=smem, size = 0x4, offset = 0x4, fixed_abs, tag = 'smem constant byte address 0x4 - core index']
  #allocation1 [shape = 'u32[144,128]{1,0:T(1,128)}', space=vmem, size = 0x12000, scoped, tag = 'internal scratch']
  %s0 = inlined_call_operand.vmem [shape: bf16[16,32,36], index: 0, kind: input, shape index: {}]
  %s1 = inlined_call_operand.vmem [shape: bf16[16,36,128], index: 1, kind: input, shape index: {}]
  %s2 = inlined_call_operand.vmem [shape: f32[16,1,128], index: 2, kind: input, shape index: {}]
  %s3 = inlined_call_operand.vmem [shape: f32[16,32,128], index: 3, kind: output, shape index: {}]
  %s4 = sld [smem:[#allocation0]]
  $region45: #{pa_conv2d_forward.1} parent=0
    _
  %s6 = ssub.s32 1, %s4
  %s7 = scalar_select 0, %s6, %s4
  loop: start=0, step=1, limit=18
  $region2: #{pa_conv2d_forward.1} parent=0 // loop_pre_header
    _
  $region3: #{pa_conv2d_forward.1} parent=0 // loop_header
    %s9 = sphi 0, %s13
    %p10 = scmp.ge.s32.totalorder %s9, 18
    %s16 = sphi 0, %s28
    %s17 = sphi 0, %s24
    %s18 = sphi 0, %s16
    %s19 = sphi 0, %s17
    %s20 = sphi 0, %s18
    %s21 = sphi 0, %s19
    %s33 = sphi 0, %s35
    %s36 = sphi 0, %s33
    %s37 = sphi 0, %s36
    %s53 = sphi 0, %s37
    %s59 = sphi 0, %s61
    %s62 = sphi 0, %s59
    %s63 = sphi 0, %s62
    %s79 = sphi 0, %s63
    %s85 = sphi 0, %s87
    %s88 = sphi 0, %s85
    %s89 = sphi 0, %s88
    %s105 = sphi 0, %s89
    %s113 = sphi 0, %s115
    %s116 = sphi 0, %s113
    %s117 = sphi 0, %s116
    %s133 = sphi 0, %s117
  $region4: #{pa_conv2d_forward.1} parent=0 // loop_header_branch
    %12 = sbr.rel (%p10) target = $region8
  $region5: #{pa_conv2d_forward.1} parent=0 // loop_body
    %s14 = ssub.s32 %s9, 1
    %s15 = ssub.s32 %s9, 2
    %s22 = sadd.s32 1, %s17
    %p23 = scmp.ge.s32.totalorder %s22, 1
    %s24 = scalar_select %p23, 0, %s22
    %s25 = sadd.s32 1, %s16
    %s26 = scalar_select %p23, %s25, %s16
    %p27 = scmp.ge.s32.totalorder %s26, 16
    %s28 = scalar_select %p27, 0, %s26
    %s29 = ssub.s32 %s16, %s28
    %s30 = ssub.s32 %s17, %s24
    %s31 = sor.u32 %s29, %s30
    %p32 = scmp.eq.s32.totalorder %s31, 0
    %s34 = sadd.s32 %s33, 1
    %s35 = scalar_select %p32, %s33, %s34
    %p38 = pneg %p32
    %p39 = scmp.eq.s32.totalorder %s9, 15
    %p40 = por %p38, %p39
    %p41 = scmp.ne.s32.totalorder %s33, %s36
    %p42 = scmp.eq.s32.totalorder %s9, 0
    %p43 = por %p41, %p42
    %p44 = scmp.ne.s32.totalorder %s33, %s36
    %p45 = scmp.eq.s32.totalorder %s14, 15
    %p46 = por %p44, %p45
    %p47 = scmp.ne.s32.totalorder %s36, %s37
    %p48 = scmp.eq.s32.totalorder %s14, 0
    %p49 = por %p47, %p48
    %p50 = scmp.ne.s32.totalorder %s36, %s37
    %p51 = scmp.eq.s32.totalorder %s15, 15
    %p52 = por %p50, %p51
    %p54 = scmp.ne.s32.totalorder %s37, %s53
    %p55 = scmp.eq.s32.totalorder %s15, 0
    %p56 = por %p54, %p55
    %s57 = ssub.s32 %s16, %s28
    %p58 = scmp.eq.s32.totalorder %s57, 0
    %s60 = sadd.s32 %s59, 1
    %s61 = scalar_select %p58, %s59, %s60
    %p64 = pneg %p58
    %p65 = scmp.eq.s32.totalorder %s9, 15
    %p66 = por %p64, %p65
    %p67 = scmp.ne.s32.totalorder %s59, %s62
    %p68 = scmp.eq.s32.totalorder %s9, 0
    %p69 = por %p67, %p68
    %p70 = scmp.ne.s32.totalorder %s59, %s62
    %p71 = scmp.eq.s32.totalorder %s14, 15
    %p72 = por %p70, %p71
    %p73 = scmp.ne.s32.totalorder %s62, %s63
    %p74 = scmp.eq.s32.totalorder %s14, 0
    %p75 = por %p73, %p74
    %p76 = scmp.ne.s32.totalorder %s62, %s63
    %p77 = scmp.eq.s32.totalorder %s15, 15
    %p78 = por %p76, %p77
    %p80 = scmp.ne.s32.totalorder %s63, %s79
    %p81 = scmp.eq.s32.totalorder %s15, 0
    %p82 = por %p80, %p81
    %s83 = ssub.s32 %s16, %s28
    %p84 = scmp.eq.s32.totalorder %s83, 0
    %s86 = sadd.s32 %s85, 1
    %s87 = scalar_select %p84, %s85, %s86
    %p90 = pneg %p84
    %p91 = scmp.eq.s32.totalorder %s9, 15
    %p92 = por %p90, %p91
    %p93 = scmp.ne.s32.totalorder %s85, %s88
    %p94 = scmp.eq.s32.totalorder %s9, 0
    %p95 = por %p93, %p94
    %p96 = scmp.ne.s32.totalorder %s85, %s88
    %p97 = scmp.eq.s32.totalorder %s14, 15
    %p98 = por %p96, %p97
    %p99 = scmp.ne.s32.totalorder %s88, %s89
    %p100 = scmp.eq.s32.totalorder %s14, 0
    %p101 = por %p99, %p100
    %p102 = scmp.ne.s32.totalorder %s88, %s89
    %p103 = scmp.eq.s32.totalorder %s15, 15
    %p104 = por %p102, %p103
    %p106 = scmp.ne.s32.totalorder %s89, %s105
    %p107 = scmp.eq.s32.totalorder %s15, 0
    %p108 = por %p106, %p107
    %s109 = ssub.s32 %s16, %s28
    %s110 = ssub.s32 %s17, %s24
    %s111 = sor.u32 %s109, %s110
    %p112 = scmp.eq.s32.totalorder %s111, 0
    %s114 = sadd.s32 %s113, 1
    %s115 = scalar_select %p112, %s113, %s114
    %p118 = pneg %p112
    %p119 = scmp.eq.s32.totalorder %s9, 15
    %p120 = por %p118, %p119
    %p121 = scmp.ne.s32.totalorder %s113, %s116
    %p122 = scmp.eq.s32.totalorder %s9, 0
    %p123 = por %p121, %p122
    %p124 = scmp.ne.s32.totalorder %s113, %s116
    %p125 = scmp.eq.s32.totalorder %s14, 15
    %p126 = por %p124, %p125
    %p127 = scmp.ne.s32.totalorder %s116, %s117
    %p128 = scmp.eq.s32.totalorder %s14, 0
    %p129 = por %p127, %p128
    %p130 = scmp.ne.s32.totalorder %s116, %s117
    %p131 = scmp.eq.s32.totalorder %s15, 15
    %p132 = por %p130, %p131
    %p134 = scmp.ne.s32.totalorder %s117, %s133
    %p135 = scmp.eq.s32.totalorder %s15, 0
    %p136 = por %p134, %p135
    %p137 = scmp.le.s32.totalorder 1, %s9
    %p138 = scmp.lt.s32.totalorder %s9, 17
    %p139 = pnand %p137, %p138
    %p140 = pneg %p139
    // Predicated region
    $region9: #{pa_conv2d_forward.1} parent=5 // pred_check
      _
    $region10: #{pa_conv2d_forward.1} parent=5 // pred_check_branch
      %142 = sbr.rel (%p139) target = $region12
    $region11: #{pa_conv2d_forward.1} parent=5 // pred_region
      %s143 = ssub.s32 %s9, 1
    $region12: #{pa_conv2d_forward.1} parent=5 // pred_fallthru
      _
    %p144 = scmp.lt.s32.totalorder %s9, 16
    // Predicated region
    $region13: #{pa_conv2d_forward.1} parent=5 // pred_check
      %p145 = pneg %p144
    $region14: #{pa_conv2d_forward.1} parent=5 // pred_check_branch
      %147 = sbr.rel (%p145) target = $region16
    $region15: #{pa_conv2d_forward.1} parent=5 // pred_region
      // Predicated region
      $region17: #{pa_conv2d_forward.1} parent=15 // pred_check
        %p148 = pneg %p43
      $region18: #{pa_conv2d_forward.1} parent=15 // pred_check_branch
        %150 = sbr.rel (%p148) target = $region20
      $region19: #{pa_conv2d_forward.1} parent=15 // pred_region
        %s151 = smul.u32 4, %s17
        %p152 = scmp.lt.s32.totalorder %s16, 15
        %s153 = scalar_select %p152, %s16, 15
        %p154 = scmp.lt.s32.totalorder %s151, 3
        %s155 = scalar_select %p154, %s151, 3
        %s156 = smul.addr %s153, 4
        %s157 = sadd.s32 %s155, %s156
        %s158 = smul.addr %s157, 4
        %s159 = scalar_lea.vmem %s0, %s158
        %s160 = smul.u32 4, %s17
      $region20: #{pa_conv2d_forward.1} parent=15 // pred_fallthru
        _
      // Predicated region
      $region21: #{pa_conv2d_forward.1} parent=15 // pred_check
        %p161 = pneg %p69
      $region22: #{pa_conv2d_forward.1} parent=15 // pred_check_branch
        %163 = sbr.rel (%p161) target = $region24
      $region23: #{pa_conv2d_forward.1} parent=15 // pred_region
        %p164 = scmp.lt.s32.totalorder %s16, 15
        %s165 = scalar_select %p164, %s16, 15
        %s166 = smul.addr %s165, 5
        %s167 = smul.addr %s166, 4
        %s168 = scalar_lea.vmem %s1, %s167
      $region24: #{pa_conv2d_forward.1} parent=15 // pred_fallthru
        _
      // Predicated region
      $region25: #{pa_conv2d_forward.1} parent=15 // pred_check
        %p169 = pneg %p95
      $region26: #{pa_conv2d_forward.1} parent=15 // pred_check_branch
        %171 = sbr.rel (%p169) target = $region28
      $region27: #{pa_conv2d_forward.1} parent=15 // pred_region
        %p172 = scmp.lt.s32.totalorder %s16, 15
        %s173 = scalar_select %p172, %s16, 15
        %s174 = scalar_lea.vmem %s2, %s173
      $region28: #{pa_conv2d_forward.1} parent=15 // pred_fallthru
        _
    $region16: #{pa_conv2d_forward.1} parent=5 // pred_fallthru
      _
    %p175 = scmp.le.s32.totalorder 1, %s9
    %p176 = scmp.lt.s32.totalorder %s9, 17
    %p177 = pnand %p175, %p176
    %p178 = pneg %p177
    // Predicated region
    $region29: #{pa_conv2d_forward.1} parent=5 // pred_check
      _
    $region30: #{pa_conv2d_forward.1} parent=5 // pred_check_branch
      %180 = sbr.rel (%p177) target = $region32
    $region31: #{pa_conv2d_forward.1} parent=5 // pred_region
      %s181 = ssub.s32 %s9, 1
      %s182 = smul.u32 4, %s19
      %p183 = scmp.lt.s32.totalorder %s18, 15
      %s184 = scalar_select %p183, %s18, 15
      %p185 = scmp.lt.s32.totalorder %s182, 3
      %s186 = scalar_select %p185, %s182, 3
      %s187 = smul.addr %s184, 4
      %s188 = sadd.s32 %s186, %s187
      %s189 = smul.addr %s188, 4
      %s190 = scalar_lea.vmem %s0, %s189
      %p191 = pneg %p49
      %p192 = pneg %p46
      %p193 = scmp.lt.s32.totalorder %s18, 15
      %s194 = scalar_select %p193, %s18, 15
      %s195 = smul.addr %s194, 5
      %s196 = smul.addr %s195, 4
      %s197 = scalar_lea.vmem %s1, %s196
      %p198 = pneg %p75
      %p199 = pneg %p72
      %p200 = scmp.lt.s32.totalorder %s18, 15
      %s201 = scalar_select %p200, %s18, 15
      %s202 = scalar_lea.vmem %s2, %s201
      %p203 = pneg %p101
      %p204 = pneg %p98
      %p205 = pneg %p129
      %p206 = pneg %p126
      %s207 = smul.u32 4, %s19
      %p208 = scmp.lt.s32.totalorder %s18, 15
      %s209 = scalar_select %p208, %s18, 15
      %p210 = scmp.lt.s32.totalorder %s207, 3
      %s211 = scalar_select %p210, %s207, 3
      %s212 = smul.addr %s209, 4
      %s213 = sadd.s32 %s211, %s212
      %s214 = smul.addr %s213, 8
      %s215 = scalar_lea.vmem %s3, %s214
      %s216 = smul.u32 4, %s19
      %p217 = scmp.lt.s32.totalorder %s18, 15
      %s218 = scalar_select %p217, %s18, 15
      %p219 = scmp.lt.s32.totalorder %s216, 3
      %s220 = scalar_select %p219, %s216, 3
      %s221 = smul.addr %s218, 4
      %s222 = sadd.s32 %s220, %s221
      %s223 = smul.addr %s222, 4
      %s224 = scalar_lea.vmem %s0, %s223
      %s225 = smul.u32 4, %s19
      %p226 = scmp.lt.s32.totalorder %s18, 15
      %s227 = scalar_select %p226, %s18, 15
      %s228 = smul.addr %s227, 5
      %s229 = smul.addr %s228, 4
      %s230 = scalar_lea.vmem %s1, %s229
      %p231 = scmp.lt.s32.totalorder %s18, 15
      %s232 = scalar_select %p231, %s18, 15
      %s233 = scalar_lea.vmem %s2, %s232
      %s234 = smul.u32 4, %s19
      %p235 = scmp.lt.s32.totalorder %s18, 15
      %s236 = scalar_select %p235, %s18, 15
      %p237 = scmp.lt.s32.totalorder %s234, 3
      %s238 = scalar_select %p237, %s234, 3
      %s239 = smul.addr %s236, 4
      %s240 = sadd.s32 %s238, %s239
      %s241 = smul.addr %s240, 8
      %s242 = scalar_lea.vmem %s3, %s241
      %s243 = smul.u32 4, %s19
      %v245 = vld [vmem:[%s224] sm:$0xf]
      %v246 = vld [vmem:[%s224 + $0x4] sm:$0xf]
      %v247 = vld [vmem:[%s224 + $0x8] sm:$0xf]
      %v248 = vld [vmem:[%s224 + $0xc] sm:$0xf]
      %v249 = vld [vmem:[%s230] sm:$0xf]
      %v250 = vld [vmem:[%s230 + $0x4] sm:$0xf]
      %v251 = vld [vmem:[%s230 + $0x8] sm:$0xf]
      %v252 = vld [vmem:[%s230 + $0xc] sm:$0xf]
      %v253 = vld [vmem:[%s230 + $0x10] sm:$0x3]
      %v254 = vld [vmem:[%s233] sm:$0x1]
      %v256 = vlaneseq
      %v257 = vshrl.u32 %v256, 7
      %v258 = vsub.s32 0, %v257
      %v259 = vrot.slane %v254, %v258
      %v265 = vunpack.c.l.b16 %v245
      %v266 = vunpack.c.l.b16 %v246
      %v267 = vunpack.c.l.b16 %v247
      %v268 = vunpack.c.l.b16 %v248
      %v269 = vpack.c.b16 %v266, %v265
      %v270 = vpack.c.b16 %v268, %v267
      %v276 = vunpack.c.l.b16 %v249
      %v277 = vunpack.c.l.b16 %v250
      %v278 = vunpack.c.l.b16 %v251
      %v279 = vunpack.c.l.b16 %v252
      %v280 = vunpack.c.l.b16 %v253
      %v281 = vpack.c.b16 %v277, %v276
      %v282 = vpack.c.b16 %v279, %v278
      %v283 = vpack.c.b16 %v280, %v280
      %vm286 = vcmask 293888
      %v288 = vsel %vm286, %v269, 0
      %v291 = vsel %vm286, %v270, 0
      %vm293 = vcmask 1041408
      %v295 = vsel %vm293, %v283, 0
      %297 = vmatprep.subr.bf16.mxu0 0
      %298 = vmatpush1.bf16.msra.mxu0 0
      %299 = vmatprep.subr.bf16.mxu0 0
      %300 = vmatpush1.bf16.msra.mxu0 0
      %301 = vmatprep.subr.bf16.mxu0 0
      %302 = vmatpush1.bf16.msra.mxu0 0
      %303 = vmatprep.subr.bf16.mxu0 0
      %304 = vmatpush1.bf16.msra.mxu0 0
      %305 = vmatprep.subr.bf16.mxu0 0
      %306 = vmatpush1.bf16.msra.mxu0 0
      %307 = vmatprep.subr.bf16.mxu0 0
      %308 = vmatpush1.bf16.msra.mxu0 %v295
      %309 = vmatprep.subr.bf16.mxu0 0
      %310 = vmatpush1.bf16.msra.mxu0 %v282
      %311 = vmatprep.subr.bf16.mxu0 0
      %312 = vmatpush1.bf16.msra.mxu0 %v281
      %313 = vmatprep.subr.bf16.mxu0 0
      %314 = vmatpush2.bf16.msra.mxu0 0
      %315 = vmatprep.subr.bf16.mxu0 0
      %316 = vmatpush2.bf16.msra.mxu0 0
      %317 = vmatprep.subr.bf16.mxu0 0
      %318 = vmatpush2.bf16.msra.mxu0 0
      %319 = vmatprep.subr.bf16.mxu0 0
      %320 = vmatpush2.bf16.msra.mxu0 0
      %321 = vmatprep.subr.bf16.mxu0 0
      %322 = vmatpush2.bf16.msra.mxu0 0
      %323 = vmatprep.subr.bf16.mxu0 0
      %324 = vmatpush2.bf16.msra.mxu0 0
      %325 = vmatprep.subr.bf16.mxu0 0
      %326 = vmatpush2.bf16.msra.mxu0 0
      %327 = vmatprep.subr.bf16.mxu0 0
      %328 = vmatpush2.bf16.msra.mxu0 0
      %329 = vmatprep.mubr.bf16.mxu0 0
      %330 = vmatmul.mubr.bf16.gmra.mxu0 %v288
      %v331 = vpop.f32.mrf.mxu0
      %v332 = vadd.f32 %v259, %v331
      %v333 = vpop.f32.mrf.mxu0
      %v334 = vpop.f32.mrf.mxu0
      %v335 = vadd.f32 %v259, %v334
      %v336 = vpop.f32.mrf.mxu0
      %337 = vmatprep.mubr.bf16.mxu0 0
      %338 = vmatmul.mubr.bf16.gmra.mxu0 %v291
      %v339 = vpop.f32.mrf.mxu0
      %v340 = vadd.f32 %v259, %v339
      %v341 = vpop.f32.mrf.mxu0
      %v342 = vpop.f32.mrf.mxu0
      %v343 = vadd.f32 %v259, %v342
      %v344 = vpop.f32.mrf.mxu0
      %345 = vdwg.mxu0
      %346 = vst [vmem:[%s242] sm:$0xff] %v332
      %347 = vst [vmem:[%s242 + $0x8] sm:$0xff] %v335
      %348 = vst [vmem:[%s242 + $0x10] sm:$0xff] %v340
      %349 = vst [vmem:[%s242 + $0x18] sm:$0xff] %v343
      %s350 = smul.u32 4, %s19
      %p351 = scmp.lt.s32.totalorder %s18, 15
      %s352 = scalar_select %p351, %s18, 15
      %p353 = scmp.lt.s32.totalorder %s350, 3
      %s354 = scalar_select %p353, %s350, 3
      %s355 = smul.addr %s352, 4
      %s356 = sadd.s32 %s354, %s355
      %s357 = smul.addr %s356, 8
      %s358 = scalar_lea.vmem %s3, %s357
      // Predicated region
      $region33: #{pa_conv2d_forward.1} parent=31 // pred_check
        %p359 = pneg %p126
      $region34: #{pa_conv2d_forward.1} parent=31 // pred_check_branch
        %361 = sbr.rel (%p359) target = $region36
      $region35: #{pa_conv2d_forward.1} parent=31 // pred_region
        %s362 = smul.u32 4, %s19
      $region36: #{pa_conv2d_forward.1} parent=31 // pred_fallthru
        _
    $region32: #{pa_conv2d_forward.1} parent=5 // pred_fallthru
      _
    %p363 = scmp.le.s32.totalorder 2, %s9
    // Predicated region
    $region37: #{pa_conv2d_forward.1} parent=5 // pred_check
      %p364 = pneg %p363
    $region38: #{pa_conv2d_forward.1} parent=5 // pred_check_branch
      %366 = sbr.rel (%p364) target = $region40
    $region39: #{pa_conv2d_forward.1} parent=5 // pred_region
      %s367 = ssub.s32 %s9, 2
      // Predicated region
      $region41: #{pa_conv2d_forward.1} parent=39 // pred_check
        %p368 = pneg %p132
      $region42: #{pa_conv2d_forward.1} parent=39 // pred_check_branch
        %370 = sbr.rel (%p368) target = $region44
      $region43: #{pa_conv2d_forward.1} parent=39 // pred_region
        %s371 = smul.u32 4, %s21
        %p372 = scmp.lt.s32.totalorder %s20, 15
        %s373 = scalar_select %p372, %s20, 15
        %p374 = scmp.lt.s32.totalorder %s371, 3
        %s375 = scalar_select %p374, %s371, 3
        %s376 = smul.addr %s373, 4
        %s377 = sadd.s32 %s375, %s376
        %s378 = smul.addr %s377, 8
        %s379 = scalar_lea.vmem %s3, %s378
      $region44: #{pa_conv2d_forward.1} parent=39 // pred_fallthru
        _
    $region40: #{pa_conv2d_forward.1} parent=5 // pred_fallthru
      _
  $region6: #{pa_conv2d_forward.1} parent=0 // loop_footer
    %s13 = sadd.s32 1, %s9
  $region7: #{pa_conv2d_forward.1} parent=0 // loop_footer_branch
    %8 = sbr.rel target = $region3
  $region8: #{pa_conv2d_forward.1} parent=0 // loop_exit
    _

</llo_original>
